<compile_context>
chip_gen: v7x
topology: tpu7x:2x2x1
jax: 0.10.0
libtpu: 0.0.40
codegen_flags: <defaults>
</compile_context>

<pallas_src>
import functools

import jax
import jax.numpy as jnp
from jax.experimental import pallas as pl
from jax.experimental.pallas import tpu as pltpu


# ---------------------------------------------------------------------------
# Tiling helpers
# ---------------------------------------------------------------------------

def _round_up(x, m):
    return ((x + m - 1) // m) * m


def _divisors_desc(n):
    return [d for d in range(n, 0, -1) if n % d == 0]


def _vmem_capacity_bytes():
    try:
        return int(pltpu.get_tpu_info().vmem_capacity_bytes)
    except Exception:
        return 64 * 1024 * 1024          # conservative fallback: v7x per-TC VMEM


def _choose_tiles(B, C, HW, dtype, block_budget):
    """Pick (bt, ct) so one (bt, ct, HW) block's *padded VMEM* footprint fits
    `block_budget`, with >= min(B, 4) batch grid steps (>= 2 per v7x TC) and,
    when possible, >= 4 total grid steps for pipelining depth."""
    item = jnp.dtype(dtype).itemsize
    sub = max(8, 32 // item)             # sublane packing: 8 f32 / 16 bf16 / 32 i8
    hw_pad = _round_up(HW, 128)          # lane padding

    def block_bytes(bt_, ct_):
        return bt_ * _round_up(ct_, sub) * hw_pad * item

    # Batch tile: keep >= min(B, 4) steps along the parallel batch axis.
    min_b_steps = min(B, 4)
    bt = 1
    for d in _divisors_desc(B):
        if B // d >= min_b_steps:
            bt = d
            break

    # Channel-tile candidates: sublane-aligned divisors of C (or full C).
    cands = sorted({d for d in _divisors_desc(C) if d % sub == 0} | {C},
                   reverse=True)

    def fitting(bt_):
        return [d for d in cands if block_bytes(bt_, d) <= block_budget]

    fits = fitting(bt)
    if not fits and bt > 1:
        bt = 1
        fits = fitting(bt)
    if not fits:
        fits = [min(cands)]              # nothing fits the budget; take smallest

    b_steps = B // bt
    preferred = [d for d in fits if b_steps * (C // d) >= 4]
    ct = max(preferred) if preferred else max(fits)
    return bt, ct, block_bytes(bt, ct)


# ---------------------------------------------------------------------------
# Fused kernel: streaming avg+max pool  ->  fc1 (accumulated over channel
# tiles) -> relu -> fc2 -> sigmoid, all in one pallas_call.
# ---------------------------------------------------------------------------

def _fused_attention_kernel(x_ref, w1t_ref, w2t_ref, o_ref,
                            h_avg_ref, h_max_ref, *, inv_hw):
    # x_ref    : (bt, ct, HW)  input dtype, spatial on the lane axis
    # w1t_ref  : (ct, Chp)     f32 fc1 weight slice for this channel tile
    # w2t_ref  : (Chp, C)      f32 fc2 weight, full + resident (constant index)
    # o_ref    : (bt, 1, C)    attention output (written at last channel step)
    # h_*_ref  : (bt, Chp)     f32 fc1 partial accumulators (avg / max branch)
    c = pl.program_id(1)

    @pl.when(c == 0)
    def _():
        h_avg_ref[...] = jnp.zeros_like(h_avg_ref)
        h_max_ref[...] = jnp.zeros_like(h_max_ref)

    x = x_ref[...]                                            # (bt, ct, HW)
    # Mean: f32 accumulation (bf16-safe), Python-constant reciprocal of HW.
    s = jnp.sum(x.astype(jnp.float32), axis=-1) * inv_hw      # (bt, ct) f32
    # Max: exact in the input dtype; cast only the reduced result.
    m = jnp.max(x, axis=-1).astype(jnp.float32)               # (bt, ct) f32

    w1t = w1t_ref[...]
    # fc1 is linear in the channel axis -> accumulate partials per channel tile.
    h_avg_ref[...] += jnp.dot(s, w1t, preferred_element_type=jnp.float32)
    h_max_ref[...] += jnp.dot(m, w1t, preferred_element_type=jnp.float32)

    @pl.when(c == pl.num_programs(1) - 1)
    def _():
        # fc2 has no bias: fc2(relu(a)) + fc2(relu(b)) == (relu(a)+relu(b)) @ W2^T
        h = jnp.maximum(h_avg_ref[...], 0.0) + jnp.maximum(h_max_ref[...], 0.0)
        out = jnp.dot(h, w2t_ref[...], preferred_element_type=jnp.float32)  # (bt, C)
        o_ref[...] = jax.nn.sigmoid(out)[:, None, :].astype(o_ref.dtype)


def _prepare_weights(w1, w2):
    """w1: (Ch, C) fc1 weight; w2: (C, Ch) fc2 weight (PyTorch layout).

    Returns transposed f32 copies with the hidden dim zero-padded to a multiple
    of 128 (lane-dense intermediates; padded rows/cols contribute exactly 0).
    Weights are constants — compute once / let jit constant-fold; kept out of
    the per-block path."""
    ch, c = w1.shape
    chp = _round_up(max(ch, 8), 128)
    w1t = jnp.zeros((c, chp), jnp.float32).at[:, :ch].set(
        jnp.transpose(w1).astype(jnp.float32))
    w2t = jnp.zeros((chp, c), jnp.float32).at[:ch, :].set(
        jnp.transpose(w2).astype(jnp.float32))
    return w1t, w2t


def channel_attention(x, w1, w2):
    """x: (B, C, H, W) NCHW; w1: (C//r, C); w2: (C, C//r) -> (B, C, 1, 1).

    Computes sigmoid(fc2(relu(fc1(avgpool(x)))) + fc2(relu(fc1(maxpool(x))))),
    matching the PyTorch channel-attention module, in a single fused Pallas
    kernel.
    """
    B, C, H, W = x.shape
    HW = H * W
    x_flat = x.reshape(B, C, HW)                    # contiguous reshape, free

    w1t, w2t = _prepare_weights(w1, w2)
    chp = w1t.shape[1]

    vmem_cap = _vmem_capacity_bytes()
    # ~16 MiB padded blocks on 128 MiB VMEM parts (v5e/v6e), ~8 MiB on v7x.
    block_budget = max(2 * 1024 * 1024, vmem_cap // 8)
    bt, ct, x_block_bytes = _choose_tiles(B, C, HW, x_flat.dtype, block_budget)

    # x is double-buffered; weights / output / scratch are small -> 8 MiB slack.
    vmem_limit = min(max(2 * x_block_bytes + 8 * 1024 * 1024,
                         16 * 1024 * 1024),
                     vmem_cap)

    kernel = functools.partial(_fused_attention_kernel, inv_hw=1.0 / float(HW))
    attn = pl.pallas_call(
        kernel,
        out_shape=jax.ShapeDtypeStruct((B, 1, C), x.dtype),
        grid=(B // bt, C // ct),
        in_specs=[
            pl.BlockSpec((bt, ct, HW), lambda b, c: (b, c, 0)),
            pl.BlockSpec((ct, chp), lambda b, c: (c, 0)),
            pl.BlockSpec((chp, C), lambda b, c: (0, 0)),
        ],
        out_specs=pl.BlockSpec((bt, 1, C), lambda b, c: (b, 0, 0)),
        scratch_shapes=[pltpu.VMEM((bt, chp), jnp.float32),
                        pltpu.VMEM((bt, chp), jnp.float32)],
        compiler_params=pltpu.CompilerParams(
            dimension_semantics=("parallel", "arbitrary"),
            vmem_limit_bytes=int(vmem_limit),
        ),
    )(x_flat, w1t, w2t)
    return attn.reshape(B, C, 1, 1)


# ---------------------------------------------------------------------------
# Pure-JAX reference
# ---------------------------------------------------------------------------

def channel_attention_ref(x, w1, w2):
    xf = x.astype(jnp.float32)
    avg = jnp.mean(xf, axis=(2, 3))                      # (B, C)
    mx = jnp.max(xf, axis=(2, 3))                        # (B, C)

    def branch(p):
        h = jnp.maximum(p @ w1.T.astype(jnp.float32), 0.0)
        return h @ w2.T.astype(jnp.float32)

    out = branch(avg) + branch(mx)
    return jax.nn.sigmoid(out)[:, :, None, None]


if __name__ == "__main__":
    key = jax.random.PRNGKey(0)
    kx, k1, k2, kx2 = jax.random.split(key, 4)

    # Small CBAM-style config: in_planes=64 -> hidden = 64 // 16 = 4
    B, C, H, W = 2, 64, 8, 8
    Ch = C // 16
    x = jax.random.normal(kx, (B, C, H, W), dtype=jnp.float32)
    w1 = jax.random.normal(k1, (Ch, C), dtype=jnp.float32) * (1.0 / jnp.sqrt(C))
    w2 = jax.random.normal(k2, (C, Ch), dtype=jnp.float32) * (1.0 / jnp.sqrt(Ch))

    # B=2 -> bt=1 with 2 channel tiles: exercises the cross-step fc1 accumulation.
    y = jax.block_until_ready(channel_attention(x, w1, w2))
    y_ref = channel_attention_ref(x, w1, w2)
    assert y.shape == (B, C, 1, 1)
    assert jnp.allclose(y, y_ref, atol=1e-5, rtol=1e-5), "f32 mismatch vs reference"

    # B=8, 14x14 -> bt=2 (>=4 batch grid steps), single channel tile.
    B2, H2, W2 = 8, 14, 14
    x2 = jax.random.normal(kx2, (B2, C, H2, W2), dtype=jnp.float32)
    y2 = jax.block_until_ready(channel_attention(x2, w1, w2))
    y2_ref = channel_attention_ref(x2, w1, w2)
    assert jnp.allclose(y2, y2_ref, atol=1e-5, rtol=1e-5), "batched mismatch vs reference"

    # bf16 activations: 16-sublane packing path, max kept in bf16, f32 sum accum.
    xb = x.astype(jnp.bfloat16)
    yb = jax.block_until_ready(channel_attention(xb, w1, w2))
    yb_ref = channel_attention_ref(xb, w1, w2)
    assert jnp.allclose(yb.astype(jnp.float32), yb_ref, atol=2e-2, rtol=2e-2), \
        "bf16 mismatch vs reference"

    print("KERNEL_OK")
</pallas_src>

<mosaic_0001>
module attributes {stable_mosaic.version = 11 : i64} {
  func.func @_fused_attention_kernel(%arg0: i32, %arg1: i32, %arg2: memref<1x32x64xf32, #tpu.memory_space<vmem>>, %arg3: memref<32x128xf32, #tpu.memory_space<vmem>>, %arg4: memref<128x64xf32, #tpu.memory_space<vmem>>, %arg5: memref<1x1x64xf32, #tpu.memory_space<vmem>>, %arg6: memref<1x128xf32, #tpu.memory_space<vmem>>, %arg7: memref<1x128xf32, #tpu.memory_space<vmem>>) attributes {dimension_semantics = [#tpu.dimension_semantics<parallel>, #tpu.dimension_semantics<arbitrary>], iteration_bounds = array<i64: 2, 2>, scalar_prefetch = 0 : i64, scratch_operands = 2 : i64, tpu.core_type = #tpu.core_type<tc>, window_params = [{transform_indices = @transform_0, window_bounds = array<i64: 1, 32, 64>}, {transform_indices = @transform_1, window_bounds = array<i64: 32, 128>}, {pipeline_mode = #tpu.pipeline_mode<synchronous>, transform_indices = @transform_2, window_bounds = array<i64: 128, 64>}, {transform_indices = @transform_3, window_bounds = array<i64: 1, 1, 64>}]} {
    %c0_i32 = arith.constant 0 : i32
    %0 = arith.cmpi eq, %arg1, %c0_i32 : i32
    %1 = arith.extui %0 : i1 to i32
    %c0_i32_0 = arith.constant 0 : i32
    %2 = arith.cmpi ne, %1, %c0_i32_0 : i32
    scf.if %2 {
      %cst_18 = arith.constant 0.000000e+00 : f32
      %20 = vector.broadcast %cst_18 : f32 to vector<1x128xf32>
      %c0_19 = arith.constant 0 : index
      %c0_20 = arith.constant 0 : index
      %21 = vector.load %arg6[%c0_19, %c0_20] : memref<1x128xf32, #tpu.memory_space<vmem>>, vector<1x128xf32>
      tpu.vector_store %arg6[%c0_19, %c0_20], %20 {strides = array<i32>} : memref<1x128xf32, #tpu.memory_space<vmem>>, vector<1x128xf32>,
      %cst_21 = arith.constant 0.000000e+00 : f32
      %22 = vector.broadcast %cst_21 : f32 to vector<1x128xf32>
      %c0_22 = arith.constant 0 : index
      %c0_23 = arith.constant 0 : index
      %23 = vector.load %arg7[%c0_22, %c0_23] : memref<1x128xf32, #tpu.memory_space<vmem>>, vector<1x128xf32>
      tpu.vector_store %arg7[%c0_22, %c0_23], %22 {strides = array<i32>} : memref<1x128xf32, #tpu.memory_space<vmem>>, vector<1x128xf32>,
    } else {
    }
    %c0 = arith.constant 0 : index
    %c0_1 = arith.constant 0 : index
    %c0_2 = arith.constant 0 : index
    %3 = vector.load %arg2[%c0, %c0_1, %c0_2] : memref<1x32x64xf32, #tpu.memory_space<vmem>>, vector<1x32x64xf32>
    %cst = arith.constant dense<0.000000e+00> : vector<1x32xf32>
    %4 = vector.multi_reduction <add>, %3, %cst [2] : vector<1x32x64xf32> to vector<1x32xf32>
    %cst_3 = arith.constant 1.562500e-02 : f32
    %5 = vector.broadcast %cst_3 : f32 to vector<1x32xf32>
    %6 = arith.mulf %4, %5 : vector<1x32xf32>
    %cst_4 = arith.constant dense<0xFF800000> : vector<1x32xf32>
    %7 = vector.multi_reduction <maximumf>, %3, %cst_4 [2] : vector<1x32x64xf32> to vector<1x32xf32>
    %c0_5 = arith.constant 0 : index
    %c0_6 = arith.constant 0 : index
    %8 = vector.load %arg3[%c0_5, %c0_6] : memref<32x128xf32, #tpu.memory_space<vmem>>, vector<32x128xf32>
    %c0_7 = arith.constant 0 : index
    %c0_8 = arith.constant 0 : index
    %9 = vector.load %arg6[%c0_7, %c0_8] : memref<1x128xf32, #tpu.memory_space<vmem>>, vector<1x128xf32>
    %cst_9 = arith.constant dense<0.000000e+00> : vector<1x128xf32>
    %10 = tpu.matmul %6, %8, %cst_9 {dimension_numbers = #tpu.dot_dimension_numbers<[1], [0], [0], [1], [0, 0, 1, 1], [], []>} : vector<1x32xf32>, vector<32x128xf32>, vector<1x128xf32> -> vector<1x128xf32>
    %11 = arith.addf %9, %10 : vector<1x128xf32>
    %c0_10 = arith.constant 0 : index
    %c0_11 = arith.constant 0 : index
    %12 = vector.load %arg6[%c0_10, %c0_11] : memref<1x128xf32, #tpu.memory_space<vmem>>, vector<1x128xf32>
    tpu.vector_store %arg6[%c0_10, %c0_11], %11 {strides = array<i32>} : memref<1x128xf32, #tpu.memory_space<vmem>>, vector<1x128xf32>,
    %c0_12 = arith.constant 0 : index
    %c0_13 = arith.constant 0 : index
    %13 = vector.load %arg7[%c0_12, %c0_13] : memref<1x128xf32, #tpu.memory_space<vmem>>, vector<1x128xf32>
    %cst_14 = arith.constant dense<0.000000e+00> : vector<1x128xf32>
    %14 = tpu.matmul %7, %8, %cst_14 {dimension_numbers = #tpu.dot_dimension_numbers<[1], [0], [0], [1], [0, 0, 1, 1], [], []>} : vector<1x32xf32>, vector<32x128xf32>, vector<1x128xf32> -> vector<1x128xf32>
    %15 = arith.addf %13, %14 : vector<1x128xf32>
    %c0_15 = arith.constant 0 : index
    %c0_16 = arith.constant 0 : index
    %16 = vector.load %arg7[%c0_15, %c0_16] : memref<1x128xf32, #tpu.memory_space<vmem>>, vector<1x128xf32>
    tpu.vector_store %arg7[%c0_15, %c0_16], %15 {strides = array<i32>} : memref<1x128xf32, #tpu.memory_space<vmem>>, vector<1x128xf32>,
    %c1_i32 = arith.constant 1 : i32
    %17 = arith.cmpi eq, %arg1, %c1_i32 : i32
    %18 = arith.extui %17 : i1 to i32
    %c0_i32_17 = arith.constant 0 : i32
    %19 = arith.cmpi ne, %18, %c0_i32_17 : i32
    scf.if %19 {
      %c0_18 = arith.constant 0 : index
      %c0_19 = arith.constant 0 : index
      %20 = vector.load %arg6[%c0_18, %c0_19] : memref<1x128xf32, #tpu.memory_space<vmem>>, vector<1x128xf32>
      %cst_20 = arith.constant 0.000000e+00 : f32
      %21 = vector.broadcast %cst_20 : f32 to vector<1x128xf32>
      %22 = arith.maximumf %20, %21 : vector<1x128xf32>
      %c0_21 = arith.constant 0 : index
      %c0_22 = arith.constant 0 : index
      %23 = vector.load %arg7[%c0_21, %c0_22] : memref<1x128xf32, #tpu.memory_space<vmem>>, vector<1x128xf32>
      %cst_23 = arith.constant 0.000000e+00 : f32
      %24 = vector.broadcast %cst_23 : f32 to vector<1x128xf32>
      %25 = arith.maximumf %23, %24 : vector<1x128xf32>
      %26 = arith.addf %22, %25 : vector<1x128xf32>
      %c0_24 = arith.constant 0 : index
      %c0_25 = arith.constant 0 : index
      %27 = vector.load %arg4[%c0_24, %c0_25] : memref<128x64xf32, #tpu.memory_space<vmem>>, vector<128x64xf32>
      %cst_26 = arith.constant dense<0.000000e+00> : vector<1x64xf32>
      %28 = tpu.matmul %26, %27, %cst_26 {dimension_numbers = #tpu.dot_dimension_numbers<[1], [0], [0], [1], [0, 0, 1, 1], [], []>} : vector<1x128xf32>, vector<128x64xf32>, vector<1x64xf32> -> vector<1x64xf32>
      %29 = arith.negf %28 : vector<1x64xf32>
      %30 = math.exp %29 : vector<1x64xf32>
      %cst_27 = arith.constant 1.000000e+00 : f32
      %31 = vector.broadcast %cst_27 : f32 to vector<1x64xf32>
      %32 = arith.addf %31, %30 : vector<1x64xf32>
      %33 = arith.divf %31, %32 : vector<1x64xf32>
      %34 = vector.shape_cast %33 : vector<1x64xf32> to vector<1x1x64xf32>
      %c0_28 = arith.constant 0 : index
      %c0_29 = arith.constant 0 : index
      %c0_30 = arith.constant 0 : index
      %35 = vector.load %arg5[%c0_28, %c0_29, %c0_30] : memref<1x1x64xf32, #tpu.memory_space<vmem>>, vector<1x1x64xf32>
      tpu.vector_store %arg5[%c0_28, %c0_29, %c0_30], %34 {strides = array<i32>} : memref<1x1x64xf32, #tpu.memory_space<vmem>>, vector<1x1x64xf32>,
    } else {
    }
    return
  }
  func.func @transform_0(%arg0: i32, %arg1: i32) -> (i32, i32, i32) {
    %c0_i32 = arith.constant 0 : i32
    %c0_i32_0 = arith.constant 0 : i32
    return %arg0, %arg1, %c0_i32 : i32, i32, i32
  }
  func.func @transform_1(%arg0: i32, %arg1: i32) -> (i32, i32) {
    %c0_i32 = arith.constant 0 : i32
    %c0_i32_0 = arith.constant 0 : i32
    return %arg1, %c0_i32 : i32, i32
  }
  func.func @transform_2(%arg0: i32, %arg1: i32) -> (i32, i32) {
    %c0_i32 = arith.constant 0 : i32
    %c0_i32_0 = arith.constant 0 : i32
    %c0_i32_1 = arith.constant 0 : i32
    return %c0_i32, %c0_i32_0 : i32, i32
  }
  func.func @transform_3(%arg0: i32, %arg1: i32) -> (i32, i32, i32) {
    %c0_i32 = arith.constant 0 : i32
    %c0_i32_0 = arith.constant 0 : i32
    %c0_i32_1 = arith.constant 0 : i32
    return %arg0, %c0_i32, %c0_i32_0 : i32, i32, i32
  }
}

</mosaic_0001>

<llo_original>
// kernel: tpu_custom_call.1
$region0: #{tpu_custom_call.1}
  #allocation0 [shape = 'u32[]', space=smem, size = 0x4, offset = 0x4, fixed_abs, tag = 'smem constant byte address 0x4 - core index']
  #allocation1 [shape = 'u32[144,128]{1,0:T(1,128)}', space=vmem, size = 0x12000, scoped, tag = 'internal scratch']
  #allocation2 [shape = 'f32[1,128]{1,0:T(1,128)}', space=vmem, size = 0x200, scoped, tag = 'scratch operand']
  #allocation3 [shape = 'f32[1,128]{1,0:T(1,128)}', space=vmem, size = 0x200, scoped, tag = 'scratch operand']
  %s0 = inlined_call_operand.vmem [shape: f32[2,64,64], index: 0, kind: input, shape index: {}]
  %s1 = inlined_call_operand.vmem [shape: f32[64,128], index: 1, kind: input, shape index: {}]
  %s2 = inlined_call_operand.vmem [shape: f32[128,64], index: 2, kind: input, shape index: {}]
  %s3 = inlined_call_operand.hbm [shape: f32[2,1,64], index: 3, kind: output, shape index: {}]
  %s4 = sld [smem:[#allocation0]]
  $region53: #{tpu_custom_call.1} parent=0
    _
  %s6 = ssub.s32 1, %s4
  %s7 = scalar_select 0, %s6, %s4
  $region1: #{tpu_custom_call.1} parent=0
    #allocation4 [shape = 'u8[1024]{0}', space=vmem, size = 0x400, scoped, tag = 'output window, operand 0']
    #allocation5 [shape = 's32[2]{0}', space=sflag, size = 0x8, scoped, tag = 'scoped memory for tpu_custom_call.1']
    %8 = vsyncpa [#allocation5], 0
    %s9 = scalar_lea.sflag [#allocation5], 1
    %10 = vsyncpa %s9, 0
    loop: start=0, step=1, limit=6
    $region2: #{tpu_custom_call.1} parent=1 // loop_pre_header
      _
    $region3: #{tpu_custom_call.1} parent=1 // loop_header
      %s12 = sphi 0, %s16
      %p13 = scmp.ge.s32.totalorder %s12, 6
      %s19 = sphi 0, %s31
      %s20 = sphi 0, %s27
      %s21 = sphi 0, %s19
      %s22 = sphi 0, %s20
      %s23 = sphi 0, %s21
      %s24 = sphi 0, %s22
      %s36 = sphi 0, %s38
      %s39 = sphi 0, %s36
      %s40 = sphi 0, %s39
      %s56 = sphi 0, %s40
      %s62 = sphi 0, %s64
      %s65 = sphi 0, %s62
      %s66 = sphi 0, %s65
      %s82 = sphi 0, %s66
      %s86 = sphi 0, %s86
      %s88 = sphi 0, %s86
      %s89 = sphi 0, %s88
      %s103 = sphi 0, %s89
      %s109 = sphi 0, %s111
      %s112 = sphi 0, %s109
      %s113 = sphi 0, %s112
      %s129 = sphi 0, %s113
    $region4: #{tpu_custom_call.1} parent=1 // loop_header_branch
      %15 = sbr.rel (%p13) target = $region8
    $region5: #{tpu_custom_call.1} parent=1 // loop_body
      %s17 = ssub.s32 %s12, 1
      %s18 = ssub.s32 %s12, 2
      %s25 = sadd.s32 1, %s20
      %p26 = scmp.ge.s32.totalorder %s25, 2
      %s27 = scalar_select %p26, 0, %s25
      %s28 = sadd.s32 1, %s19
      %s29 = scalar_select %p26, %s28, %s19
      %p30 = scmp.ge.s32.totalorder %s29, 2
      %s31 = scalar_select %p30, 0, %s29
      %s32 = ssub.s32 %s19, %s31
      %s33 = ssub.s32 %s20, %s27
      %s34 = sor.u32 %s32, %s33
      %p35 = scmp.eq.s32.totalorder %s34, 0
      %s37 = sadd.s32 %s36, 1
      %s38 = scalar_select %p35, %s36, %s37
      %p41 = pneg %p35
      %p42 = scmp.eq.s32.totalorder %s12, 3
      %p43 = por %p41, %p42
      %p44 = scmp.ne.s32.totalorder %s36, %s39
      %p45 = scmp.eq.s32.totalorder %s12, 0
      %p46 = por %p44, %p45
      %p47 = scmp.ne.s32.totalorder %s36, %s39
      %p48 = scmp.eq.s32.totalorder %s17, 3
      %p49 = por %p47, %p48
      %p50 = scmp.ne.s32.totalorder %s39, %s40
      %p51 = scmp.eq.s32.totalorder %s17, 0
      %p52 = por %p50, %p51
      %p53 = scmp.ne.s32.totalorder %s39, %s40
      %p54 = scmp.eq.s32.totalorder %s18, 3
      %p55 = por %p53, %p54
      %p57 = scmp.ne.s32.totalorder %s40, %s56
      %p58 = scmp.eq.s32.totalorder %s18, 0
      %p59 = por %p57, %p58
      %s60 = ssub.s32 %s20, %s27
      %p61 = scmp.eq.s32.totalorder %s60, 0
      %s63 = sadd.s32 %s62, 1
      %s64 = scalar_select %p61, %s62, %s63
      %p67 = pneg %p61
      %p68 = scmp.eq.s32.totalorder %s12, 3
      %p69 = por %p67, %p68
      %p70 = scmp.ne.s32.totalorder %s62, %s65
      %p71 = scmp.eq.s32.totalorder %s12, 0
      %p72 = por %p70, %p71
      %p73 = scmp.ne.s32.totalorder %s62, %s65
      %p74 = scmp.eq.s32.totalorder %s17, 3
      %p75 = por %p73, %p74
      %p76 = scmp.ne.s32.totalorder %s65, %s66
      %p77 = scmp.eq.s32.totalorder %s17, 0
      %p78 = por %p76, %p77
      %p79 = scmp.ne.s32.totalorder %s65, %s66
      %p80 = scmp.eq.s32.totalorder %s18, 3
      %p81 = por %p79, %p80
      %p83 = scmp.ne.s32.totalorder %s66, %s82
      %p84 = scmp.eq.s32.totalorder %s18, 0
      %p85 = por %p83, %p84
      %s87 = sadd.s32 %s86, 1
      %p90 = scmp.eq.s32.totalorder %s12, 3
      %p91 = scmp.ne.s32.totalorder %s86, %s88
      %p92 = scmp.eq.s32.totalorder %s12, 0
      %p93 = por %p91, %p92
      %p94 = scmp.ne.s32.totalorder %s86, %s88
      %p95 = scmp.eq.s32.totalorder %s17, 3
      %p96 = por %p94, %p95
      %p97 = scmp.ne.s32.totalorder %s88, %s89
      %p98 = scmp.eq.s32.totalorder %s17, 0
      %p99 = por %p97, %p98
      %p100 = scmp.ne.s32.totalorder %s88, %s89
      %p101 = scmp.eq.s32.totalorder %s18, 3
      %p102 = por %p100, %p101
      %p104 = scmp.ne.s32.totalorder %s89, %s103
      %p105 = scmp.eq.s32.totalorder %s18, 0
      %p106 = por %p104, %p105
      %s107 = ssub.s32 %s19, %s31
      %p108 = scmp.eq.s32.totalorder %s107, 0
      %s110 = sadd.s32 %s109, 1
      %s111 = scalar_select %p108, %s109, %s110
      %p114 = pneg %p108
      %p115 = scmp.eq.s32.totalorder %s12, 3
      %p116 = por %p114, %p115
      %p117 = scmp.ne.s32.totalorder %s109, %s112
      %p118 = scmp.eq.s32.totalorder %s12, 0
      %p119 = por %p117, %p118
      %p120 = scmp.ne.s32.totalorder %s109, %s112
      %p121 = scmp.eq.s32.totalorder %s17, 3
      %p122 = por %p120, %p121
      %p123 = scmp.ne.s32.totalorder %s112, %s113
      %p124 = scmp.eq.s32.totalorder %s17, 0
      %p125 = por %p123, %p124
      %p126 = scmp.ne.s32.totalorder %s112, %s113
      %p127 = scmp.eq.s32.totalorder %s18, 3
      %p128 = por %p126, %p127
      %p130 = scmp.ne.s32.totalorder %s113, %s129
      %p131 = scmp.eq.s32.totalorder %s18, 0
      %p132 = por %p130, %p131
      %p133 = scmp.le.s32.totalorder 1, %s12
      %p134 = scmp.lt.s32.totalorder %s12, 5
      %p135 = pnand %p133, %p134
      %p136 = pneg %p135
      // Predicated region
      $region9: #{tpu_custom_call.1} parent=5 // pred_check
        _
      $region10: #{tpu_custom_call.1} parent=5 // pred_check_branch
        %138 = sbr.rel (%p135) target = $region12
      $region11: #{tpu_custom_call.1} parent=5 // pred_region
        %s139 = ssub.s32 %s12, 1
        // Predicated region
        $region13: #{tpu_custom_call.1} parent=11 // pred_check
          %p140 = pneg %p99
        $region14: #{tpu_custom_call.1} parent=11 // pred_check_branch
          %142 = sbr.rel (%p140) target = $region16
        $region15: #{tpu_custom_call.1} parent=11 // pred_region
          _
        $region16: #{tpu_custom_call.1} parent=11 // pred_fallthru
          _
      $region12: #{tpu_custom_call.1} parent=5 // pred_fallthru
        _
      %p143 = scmp.lt.s32.totalorder %s12, 4
      // Predicated region
      $region17: #{tpu_custom_call.1} parent=5 // pred_check
        %p144 = pneg %p143
      $region18: #{tpu_custom_call.1} parent=5 // pred_check_branch
        %146 = sbr.rel (%p144) target = $region20
      $region19: #{tpu_custom_call.1} parent=5 // pred_region
        // Predicated region
        $region21: #{tpu_custom_call.1} parent=19 // pred_check
          %p147 = pneg %p46
        $region22: #{tpu_custom_call.1} parent=19 // pred_check_branch
          %149 = sbr.rel (%p147) target = $region24
        $region23: #{tpu_custom_call.1} parent=19 // pred_region
          %s150 = smul.u32 4, %s20
          %p151 = scmp.lt.s32.totalorder %s19, 1
          %s152 = scalar_select %p151, %s19, 1
          %p153 = scmp.lt.s32.totalorder %s150, 7
          %s154 = scalar_select %p153, %s150, 7
          %s155 = smul.addr %s152, 8
          %s156 = sadd.s32 %s154, %s155
          %s157 = smul.addr %s156, 8
          %s158 = scalar_lea.vmem %s0, %s157
          %s159 = smul.u32 4, %s20
        $region24: #{tpu_custom_call.1} parent=19 // pred_fallthru
          _
        // Predicated region
        $region25: #{tpu_custom_call.1} parent=19 // pred_check
          %p160 = pneg %p72
        $region26: #{tpu_custom_call.1} parent=19 // pred_check_branch
          %162 = sbr.rel (%p160) target = $region28
        $region27: #{tpu_custom_call.1} parent=19 // pred_region
          %s163 = smul.u32 4, %s20
          %p164 = scmp.lt.s32.totalorder %s163, 7
          %s165 = scalar_select %p164, %s163, 7
          %s166 = smul.addr %s165, 8
          %s167 = scalar_lea.vmem %s1, %s166
          %s168 = smul.u32 4, %s20
        $region28: #{tpu_custom_call.1} parent=19 // pred_fallthru
          _
      $region20: #{tpu_custom_call.1} parent=5 // pred_fallthru
        _
      %p169 = scmp.le.s32.totalorder 1, %s12
      %p170 = scmp.lt.s32.totalorder %s12, 5
      %p171 = pnand %p169, %p170
      %p172 = pneg %p171
      // Predicated region
      $region29: #{tpu_custom_call.1} parent=5 // pred_check
        _
      $region30: #{tpu_custom_call.1} parent=5 // pred_check_branch
        %174 = sbr.rel (%p171) target = $region32
      $region31: #{tpu_custom_call.1} parent=5 // pred_region
        %s175 = ssub.s32 %s12, 1
        %s176 = smul.u32 4, %s22
        %p177 = scmp.lt.s32.totalorder %s21, 1
        %s178 = scalar_select %p177, %s21, 1
        %p179 = scmp.lt.s32.totalorder %s176, 7
        %s180 = scalar_select %p179, %s176, 7
        %s181 = smul.addr %s178, 8
        %s182 = sadd.s32 %s180, %s181
        %s183 = smul.addr %s182, 8
        %s184 = scalar_lea.vmem %s0, %s183
        %p185 = pneg %p52
        %p186 = pneg %p49
        %s187 = smul.u32 4, %s22
        %p188 = scmp.lt.s32.totalorder %s187, 7
        %s189 = scalar_select %p188, %s187, 7
        %s190 = smul.addr %s189, 8
        %s191 = scalar_lea.vmem %s1, %s190
        %p192 = pneg %p78
        %p193 = pneg %p75
        %p194 = pneg %p99
        %p195 = pneg %p96
        %p196 = pneg %p125
        %p197 = pneg %p122
        %s198 = sand.u32 %s112, 1
        %s199 = scalar_lea.sflag [#allocation5], %s198
        %s200 = sand.u32 %s112, 1
        %s201 = scalar_lea.vmem [#allocation4], %s200
        %s202 = smul.u32 4, %s22
        %p203 = scmp.lt.s32.totalorder %s21, 1
        %s204 = scalar_select %p203, %s21, 1
        %p205 = scmp.lt.s32.totalorder %s202, 7
        %s206 = scalar_select %p205, %s202, 7
        %s207 = smul.addr %s204, 8
        %s208 = sadd.s32 %s206, %s207
        %s209 = smul.addr %s208, 8
        %s210 = scalar_lea.vmem %s0, %s209
        %s211 = smul.u32 4, %s22
        %s212 = smul.u32 4, %s22
        %p213 = scmp.lt.s32.totalorder %s212, 7
        %s214 = scalar_select %p213, %s212, 7
        %s215 = smul.addr %s214, 8
        %s216 = scalar_lea.vmem %s1, %s215
        %s217 = smul.u32 4, %s22
        %p218 = scmp.eq.s32.totalorder %s22, 0
        // Predicated region
        $region33: #{tpu_custom_call.1} parent=31 // pred_check
          %p219 = pneg %p218
        $region34: #{tpu_custom_call.1} parent=31 // pred_check_branch
          %221 = sbr.rel (%p219) target = $region36
        $region35: #{tpu_custom_call.1} parent=31 // pred_region
          %222 = vst [vmem:[#allocation2] sm:$0x1] 0.0
          %223 = vst [vmem:[#allocation3] sm:$0x1] 0.0
        $region36: #{tpu_custom_call.1} parent=31 // pred_fallthru
          _
        %v224 = vld [vmem:[%s210] sm:$0xff]
        %v225 = vld [vmem:[%s210 + $0x8] sm:$0xff]
        %v226 = vld [vmem:[%s210 + $0x10] sm:$0xff]
        %v227 = vld [vmem:[%s210 + $0x18] sm:$0xff]
        %vm228 = vcmask 523264
        %v229 = vsel %vm228, %v224, 0.0
        %230 = vadd.xlane.f32.xlu0 %v229
        %v231 = vpop.xlane.xlu0 %230
        %v232 = vsel %vm228, %v225, 0.0
        %233 = vadd.xlane.f32.xlu0 %v232
        %v234 = vpop.xlane.xlu0 %233
        %v235 = vsel %vm228, %v226, 0.0
        %236 = vadd.xlane.f32.xlu0 %v235
        %v237 = vpop.xlane.xlu0 %236
        %v238 = vsel %vm228, %v227, 0.0
        %239 = vadd.xlane.f32.xlu0 %v238
        %v240 = vpop.xlane.xlu0 %239
        %v241 = vmul.f32 %v231, 0.015625
        %v242 = vmul.f32 %v234, 0.015625
        %v243 = vmul.f32 %v237, 0.015625
        %v244 = vmul.f32 %v240, 0.015625
        %v245 = vsel %vm228, %v224, -inf
        %246 = vmax.xlane.f32.xlu0 %v245
        %v247 = vpop.xlane.xlu0 %246
        %v248 = vsel %vm228, %v225, -inf
        %249 = vmax.xlane.f32.xlu0 %v248
        %v250 = vpop.xlane.xlu0 %249
        %v251 = vsel %vm228, %v226, -inf
        %252 = vmax.xlane.f32.xlu0 %v251
        %v253 = vpop.xlane.xlu0 %252
        %v254 = vsel %vm228, %v227, -inf
        %255 = vmax.xlane.f32.xlu0 %v254
        %v256 = vpop.xlane.xlu0 %255
        %v257 = vld [vmem:[%s216] sm:$0xff]
        %v258 = vld [vmem:[%s216 + $0x8] sm:$0xff]
        %v259 = vld [vmem:[%s216 + $0x10] sm:$0xff]
        %v260 = vld [vmem:[%s216 + $0x18] sm:$0xff]
        %v261 = vld [vmem:[#allocation2] sm:$0x1]
        %v266 = vlaneseq
        %v267 = vand.u32 %v266, 127
        %v268 = vlaneseq
        %v269 = vshrl.u32 %v268, 7
        %v270 = vsub.s32 %v267, %v269
        %v271 = vrot.slane %v241, %v270
        %v272 = vadd.s32 %v267, 4294967288
        %v273 = vlaneseq
        %v274 = vshrl.u32 %v273, 7
        %v275 = vsub.s32 %v272, %v274
        %v276 = vrot.slane %v242, %v275
        %vm277 = vcmask 130112
        %v278 = vsel %vm277, %v276, %v271
        %v279 = vadd.s32 %v267, 4294967280
        %v280 = vlaneseq
        %v281 = vshrl.u32 %v280, 7
        %v282 = vsub.s32 %v279, %v281
        %v283 = vrot.slane %v243, %v282
        %vm284 = vcmask 195712
        %v285 = vsel %vm284, %v283, %v278
        %v286 = vadd.s32 %v267, 4294967272
        %v287 = vlaneseq
        %v288 = vshrl.u32 %v287, 7
        %v289 = vsub.s32 %v286, %v288
        %v290 = vrot.slane %v244, %v289
        %vm291 = vcmask 261312
        %v292 = vsel %vm291, %v290, %v285
        %vm293 = vcmask 261120
        %v294 = vsel %vm293, %v292, 0
        %296 = vmatprep.subr.mxu0 0.0
        %297 = vmatpush1.msra.mxu0 %v257
        %298 = vmatprep.subr.mxu0 0.0
        %299 = vmatpush1.msra.mxu0 %v258
        %300 = vmatprep.subr.mxu0 0.0
        %301 = vmatpush1.msra.mxu0 %v259
        %302 = vmatprep.subr.mxu0 0.0
        %303 = vmatpush1.msra.mxu0 %v260
        %304 = vmatprep.subr.mxu0 0.0
        %305 = vmatpush1.msra.mxu0 0.0
        %306 = vmatprep.subr.mxu0 0.0
        %307 = vmatpush1.msra.mxu0 0.0
        %308 = vmatprep.subr.mxu0 0.0
        %309 = vmatpush1.msra.mxu0 0.0
        %310 = vmatprep.subr.mxu0 0.0
        %311 = vmatpush1.msra.mxu0 0.0
        %312 = vmatprep.subr.mxu0 0.0
        %313 = vmatpush1.msra.mxu0 0.0
        %314 = vmatprep.subr.mxu0 0.0
        %315 = vmatpush1.msra.mxu0 0.0
        %316 = vmatprep.subr.mxu0 0.0
        %317 = vmatpush1.msra.mxu0 0.0
        %318 = vmatprep.subr.mxu0 0.0
        %319 = vmatpush1.msra.mxu0 0.0
        %320 = vmatprep.subr.mxu0 0.0
        %321 = vmatpush1.msra.mxu0 0.0
        %322 = vmatprep.subr.mxu0 0.0
        %323 = vmatpush1.msra.mxu0 0.0
        %324 = vmatprep.subr.mxu0 0.0
        %325 = vmatpush1.msra.mxu0 0.0
        %326 = vmatprep.subr.mxu0 0.0
        %327 = vmatpush1.msra.mxu0 0.0
        %328 = vmatprep.subr.mxu0 0.0
        %329 = vmatpush1.msra.mxu0 0.0
        %330 = vmatprep.subr.mxu0 0.0
        %331 = vmatpush1.msra.mxu0 0.0
        %332 = vmatprep.subr.mxu0 0.0
        %333 = vmatpush1.msra.mxu0 0.0
        %334 = vmatprep.subr.mxu0 0.0
        %335 = vmatpush1.msra.mxu0 0.0
        %336 = vmatprep.subr.mxu0 0.0
        %337 = vmatpush1.msra.mxu0 0.0
        %338 = vmatprep.subr.mxu0 0.0
        %339 = vmatpush1.msra.mxu0 0.0
        %340 = vmatprep.subr.mxu0 0.0
        %341 = vmatpush1.msra.mxu0 0.0
        %342 = vmatprep.subr.mxu0 0.0
        %343 = vmatpush1.msra.mxu0 0.0
        %344 = vmatprep.subr.mxu0 0.0
        %345 = vmatpush1.msra.mxu0 0.0
        %346 = vmatprep.subr.mxu0 0.0
        %347 = vmatpush1.msra.mxu0 0.0
        %348 = vmatprep.subr.mxu0 0.0
        %349 = vmatpush1.msra.mxu0 0.0
        %350 = vmatprep.subr.mxu0 0.0
        %351 = vmatpush1.msra.mxu0 0.0
        %352 = vmatprep.subr.mxu0 0.0
        %353 = vmatpush1.msra.mxu0 0.0
        %354 = vmatprep.subr.mxu0 0.0
        %355 = vmatpush1.msra.mxu0 0.0
        %356 = vmatprep.subr.mxu0 0.0
        %357 = vmatpush1.msra.mxu0 0.0
        %358 = vmatprep.subr.mxu0 0.0
        %359 = vmatpush1.msra.mxu0 0.0
        %360 = vmatprep.mubr.f32.mxu0 0.0
        %361 = vmatmul.mubr.f32.gmra.mrb[0].mxu0 %v294
        %v362 = vpop.f32.mrb[0].mxu0
        %v363 = vadd.f32 0.0, %v362
        %v364 = vpop.f32.mrb[0].mxu0
        %365 = vdwg.mxu0
        %v366 = vadd.f32 %v261, %v363
        %367 = vst [vmem:[#allocation2] sm:$0x1] %v366
        %v368 = vld [vmem:[#allocation3] sm:$0x1]
        %v373 = vlaneseq
        %v374 = vshrl.u32 %v373, 7
        %v375 = vsub.s32 %v267, %v374
        %v376 = vrot.slane %v247, %v375
        %v377 = vlaneseq
        %v378 = vshrl.u32 %v377, 7
        %v379 = vsub.s32 %v272, %v378
        %v380 = vrot.slane %v250, %v379
        %v381 = vsel %vm277, %v380, %v376
        %v382 = vlaneseq
        %v383 = vshrl.u32 %v382, 7
        %v384 = vsub.s32 %v279, %v383
        %v385 = vrot.slane %v253, %v384
        %v386 = vsel %vm284, %v385, %v381
        %v387 = vlaneseq
        %v388 = vshrl.u32 %v387, 7
        %v389 = vsub.s32 %v286, %v388
        %v390 = vrot.slane %v256, %v389
        %v391 = vsel %vm291, %v390, %v386
        %v392 = vsel %vm293, %v391, 0
        %394 = vmatprep.subr.mxu0 0.0
        %395 = vmatpush1.msra.mxu0 %v257
        %396 = vmatprep.subr.mxu0 0.0
        %397 = vmatpush1.msra.mxu0 %v258
        %398 = vmatprep.subr.mxu0 0.0
        %399 = vmatpush1.msra.mxu0 %v259
        %400 = vmatprep.subr.mxu0 0.0
        %401 = vmatpush1.msra.mxu0 %v260
        %402 = vmatprep.subr.mxu0 0.0
        %403 = vmatpush1.msra.mxu0 0.0
        %404 = vmatprep.subr.mxu0 0.0
        %405 = vmatpush1.msra.mxu0 0.0
        %406 = vmatprep.subr.mxu0 0.0
        %407 = vmatpush1.msra.mxu0 0.0
        %408 = vmatprep.subr.mxu0 0.0
        %409 = vmatpush1.msra.mxu0 0.0
        %410 = vmatprep.subr.mxu0 0.0
        %411 = vmatpush1.msra.mxu0 0.0
        %412 = vmatprep.subr.mxu0 0.0
        %413 = vmatpush1.msra.mxu0 0.0
        %414 = vmatprep.subr.mxu0 0.0
        %415 = vmatpush1.msra.mxu0 0.0
        %416 = vmatprep.subr.mxu0 0.0
        %417 = vmatpush1.msra.mxu0 0.0
        %418 = vmatprep.subr.mxu0 0.0
        %419 = vmatpush1.msra.mxu0 0.0
        %420 = vmatprep.subr.mxu0 0.0
        %421 = vmatpush1.msra.mxu0 0.0
        %422 = vmatprep.subr.mxu0 0.0
        %423 = vmatpush1.msra.mxu0 0.0
        %424 = vmatprep.subr.mxu0 0.0
        %425 = vmatpush1.msra.mxu0 0.0
        %426 = vmatprep.subr.mxu0 0.0
        %427 = vmatpush1.msra.mxu0 0.0
        %428 = vmatprep.subr.mxu0 0.0
        %429 = vmatpush1.msra.mxu0 0.0
        %430 = vmatprep.subr.mxu0 0.0
        %431 = vmatpush1.msra.mxu0 0.0
        %432 = vmatprep.subr.mxu0 0.0
        %433 = vmatpush1.msra.mxu0 0.0
        %434 = vmatprep.subr.mxu0 0.0
        %435 = vmatpush1.msra.mxu0 0.0
        %436 = vmatprep.subr.mxu0 0.0
        %437 = vmatpush1.msra.mxu0 0.0
        %438 = vmatprep.subr.mxu0 0.0
        %439 = vmatpush1.msra.mxu0 0.0
        %440 = vmatprep.subr.mxu0 0.0
        %441 = vmatpush1.msra.mxu0 0.0
        %442 = vmatprep.subr.mxu0 0.0
        %443 = vmatpush1.msra.mxu0 0.0
        %444 = vmatprep.subr.mxu0 0.0
        %445 = vmatpush1.msra.mxu0 0.0
        %446 = vmatprep.subr.mxu0 0.0
        %447 = vmatpush1.msra.mxu0 0.0
        %448 = vmatprep.subr.mxu0 0.0
        %449 = vmatpush1.msra.mxu0 0.0
        %450 = vmatprep.subr.mxu0 0.0
        %451 = vmatpush1.msra.mxu0 0.0
        %452 = vmatprep.subr.mxu0 0.0
        %453 = vmatpush1.msra.mxu0 0.0
        %454 = vmatprep.subr.mxu0 0.0
        %455 = vmatpush1.msra.mxu0 0.0
        %456 = vmatprep.subr.mxu0 0.0
        %457 = vmatpush1.msra.mxu0 0.0
        %458 = vmatprep.mubr.f32.mxu0 0.0
        %459 = vmatmul.mubr.f32.gmra.mrb[0].mxu0 %v392
        %v460 = vpop.f32.mrb[0].mxu0
        %v461 = vadd.f32 0.0, %v460
        %v462 = vpop.f32.mrb[0].mxu0
        %463 = vdwg.mxu0
        %v464 = vadd.f32 %v368, %v461
        %465 = vst [vmem:[#allocation3] sm:$0x1] %v464
        %p466 = scmp.eq.s32.totalorder %s22, 1
        // Predicated region
        $region37: #{tpu_custom_call.1} parent=31 // pred_check
          %p467 = pneg %p466
        $region38: #{tpu_custom_call.1} parent=31 // pred_check_branch
          %469 = sbr.rel (%p467) target = $region40
        $region39: #{tpu_custom_call.1} parent=31 // pred_region
          %v470 = vld [vmem:[#allocation2] sm:$0x1]
          %v471 = vmax.f32 %v470, 0.0
          %v472 = vld [vmem:[#allocation3] sm:$0x1]
          %v473 = vmax.f32 %v472, 0.0
          %v474 = vadd.f32 %v471, %v473
          %v475 = vld [vmem:[%s2] sm:$0xff]
          %v476 = vld [vmem:[%s2 + $0x8] sm:$0xff]
          %v477 = vld [vmem:[%s2 + $0x10] sm:$0xff]
          %v478 = vld [vmem:[%s2 + $0x18] sm:$0xff]
          %v479 = vld [vmem:[%s2 + $0x20] sm:$0xff]
          %v480 = vld [vmem:[%s2 + $0x28] sm:$0xff]
          %v481 = vld [vmem:[%s2 + $0x30] sm:$0xff]
          %v482 = vld [vmem:[%s2 + $0x38] sm:$0xff]
          %v483 = vld [vmem:[%s2 + $0x40] sm:$0xff]
          %v484 = vld [vmem:[%s2 + $0x48] sm:$0xff]
          %v485 = vld [vmem:[%s2 + $0x50] sm:$0xff]
          %v486 = vld [vmem:[%s2 + $0x58] sm:$0xff]
          %v487 = vld [vmem:[%s2 + $0x60] sm:$0xff]
          %v488 = vld [vmem:[%s2 + $0x68] sm:$0xff]
          %v489 = vld [vmem:[%s2 + $0x70] sm:$0xff]
          %v490 = vld [vmem:[%s2 + $0x78] sm:$0xff]
          %491 = vmatprep.subr.mxu0 0.0
          %492 = vmatpush1.msra.mxu0 %v475
          %493 = vmatprep.subr.mxu0 0.0
          %494 = vmatpush1.msra.mxu0 %v476
          %495 = vmatprep.subr.mxu0 0.0
          %496 = vmatpush1.msra.mxu0 %v477
          %497 = vmatprep.subr.mxu0 0.0
          %498 = vmatpush1.msra.mxu0 %v478
          %499 = vmatprep.subr.mxu0 0.0
          %500 = vmatpush1.msra.mxu0 %v479
          %501 = vmatprep.subr.mxu0 0.0
          %502 = vmatpush1.msra.mxu0 %v480
          %503 = vmatprep.subr.mxu0 0.0
          %504 = vmatpush1.msra.mxu0 %v481
          %505 = vmatprep.subr.mxu0 0.0
          %506 = vmatpush1.msra.mxu0 %v482
          %507 = vmatprep.subr.mxu0 0.0
          %508 = vmatpush1.msra.mxu0 %v483
          %509 = vmatprep.subr.mxu0 0.0
          %510 = vmatpush1.msra.mxu0 %v484
          %511 = vmatprep.subr.mxu0 0.0
          %512 = vmatpush1.msra.mxu0 %v485
          %513 = vmatprep.subr.mxu0 0.0
          %514 = vmatpush1.msra.mxu0 %v486
          %515 = vmatprep.subr.mxu0 0.0
          %516 = vmatpush1.msra.mxu0 %v487
          %517 = vmatprep.subr.mxu0 0.0
          %518 = vmatpush1.msra.mxu0 %v488
          %519 = vmatprep.subr.mxu0 0.0
          %520 = vmatpush1.msra.mxu0 %v489
          %521 = vmatprep.subr.mxu0 0.0
          %522 = vmatpush1.msra.mxu0 %v490
          %523 = vmatprep.subr.mxu0 0.0
          %524 = vmatpush1.msra.mxu0 0.0
          %525 = vmatprep.subr.mxu0 0.0
          %526 = vmatpush1.msra.mxu0 0.0
          %527 = vmatprep.subr.mxu0 0.0
          %528 = vmatpush1.msra.mxu0 0.0
          %529 = vmatprep.subr.mxu0 0.0
          %530 = vmatpush1.msra.mxu0 0.0
          %531 = vmatprep.subr.mxu0 0.0
          %532 = vmatpush1.msra.mxu0 0.0
          %533 = vmatprep.subr.mxu0 0.0
          %534 = vmatpush1.msra.mxu0 0.0
          %535 = vmatprep.subr.mxu0 0.0
          %536 = vmatpush1.msra.mxu0 0.0
          %537 = vmatprep.subr.mxu0 0.0
          %538 = vmatpush1.msra.mxu0 0.0
          %539 = vmatprep.subr.mxu0 0.0
          %540 = vmatpush1.msra.mxu0 0.0
          %541 = vmatprep.subr.mxu0 0.0
          %542 = vmatpush1.msra.mxu0 0.0
          %543 = vmatprep.subr.mxu0 0.0
          %544 = vmatpush1.msra.mxu0 0.0
          %545 = vmatprep.subr.mxu0 0.0
          %546 = vmatpush1.msra.mxu0 0.0
          %547 = vmatprep.subr.mxu0 0.0
          %548 = vmatpush1.msra.mxu0 0.0
          %549 = vmatprep.subr.mxu0 0.0
          %550 = vmatpush1.msra.mxu0 0.0
          %551 = vmatprep.subr.mxu0 0.0
          %552 = vmatpush1.msra.mxu0 0.0
          %553 = vmatprep.subr.mxu0 0.0
          %554 = vmatpush1.msra.mxu0 0.0
          %555 = vmatprep.mubr.f32.mxu0 0.0
          %556 = vmatmul.mubr.f32.gmra.mrb[0].mxu0 %v474
          %v557 = vpop.f32.mrb[0].mxu0
          %v558 = vadd.f32 0.0, %v557
          %v559 = vpop.f32.mrb[0].mxu0
          %560 = vdwg.mxu0
          %v561 = vxor.u32 %v558, 2147483648
          %v562 = vmul.f32 %v561, 1.442695
          %v563 = vpow.pop %v562
          %v564 = vadd.f32 %v563, 1.0
          %v565 = vrcp.pop %v564
          %v566 = vmul.f32 1.0, %v565
          %vm567 = vcmask 516096
          %568 = vst.msk [vmem:[%s201] sm:$0x1] %vm567, %v566
        $region40: #{tpu_custom_call.1} parent=31 // pred_fallthru
          _
        %s569 = sand.u32 %s112, 1
        %s570 = scalar_lea.sflag [#allocation5], %s569
        %s571 = sand.u32 %s112, 1
        %s572 = scalar_lea.vmem [#allocation4], %s571
        // Predicated region
        $region41: #{tpu_custom_call.1} parent=31 // pred_check
          %p573 = pneg %p122
        $region42: #{tpu_custom_call.1} parent=31 // pred_check_branch
          %575 = sbr.rel (%p573) target = $region44
        $region43: #{tpu_custom_call.1} parent=31 // pred_region
          %s577 = ssub.s32 16, 16
          %578 = vsyncadd %s570, %s577
          %s579 = smul.addr %s21, 16
          %s580 = scalar_lea.hbm %s3, %s579
          %s582 = sshll.u32 %s572, 4
          %s583 = int_to_ptr.vmem [resolvable:$true] %s582
          %585 = dma.vmem_to_hbm [thread:$0]  %s583, 16, %s580, %s570
        $region44: #{tpu_custom_call.1} parent=31 // pred_fallthru
          _
      $region32: #{tpu_custom_call.1} parent=5 // pred_fallthru
        _
      %p586 = scmp.le.s32.totalorder 2, %s12
      // Predicated region
      $region45: #{tpu_custom_call.1} parent=5 // pred_check
        %p587 = pneg %p586
      $region46: #{tpu_custom_call.1} parent=5 // pred_check_branch
        %589 = sbr.rel (%p587) target = $region48
      $region47: #{tpu_custom_call.1} parent=5 // pred_region
        %s590 = ssub.s32 %s12, 2
        // Predicated region
        $region49: #{tpu_custom_call.1} parent=47 // pred_check
          %p591 = pneg %p128
        $region50: #{tpu_custom_call.1} parent=47 // pred_check_branch
          %593 = sbr.rel (%p591) target = $region52
        $region51: #{tpu_custom_call.1} parent=47 // pred_region
          %s594 = sand.u32 %s113, 1
          %s595 = scalar_lea.sflag [#allocation5], %s594
          %s596 = sand.u32 %s113, 1
          %s597 = scalar_lea.vmem [#allocation4], %s596
          %598 = dma.done %s595, 16
        $region52: #{tpu_custom_call.1} parent=47 // pred_fallthru
          _
      $region48: #{tpu_custom_call.1} parent=5 // pred_fallthru
        _
    $region6: #{tpu_custom_call.1} parent=1 // loop_footer
      %s16 = sadd.s32 1, %s12
    $region7: #{tpu_custom_call.1} parent=1 // loop_footer_branch
      %11 = sbr.rel target = $region3
    $region8: #{tpu_custom_call.1} parent=1 // loop_exit
      _
    %599 = vsyncpa [#allocation5], 1
    %s600 = scalar_lea.sflag [#allocation5], 1
    %601 = vsyncpa %s600, 1

</llo_original>
